<compile_context>
chip_gen: v7x
topology: tpu7x:2x2x1
jax: 0.10.0
libtpu: 0.0.40
codegen_flags: <defaults>
</compile_context>

<pallas_src>
import jax
import jax.numpy as jnp
from jax.experimental import pallas as pl
from jax.experimental.pallas import tpu as pltpu


_LANE = 128
_VMEM_PIPELINE_BUDGET = 28 * 1024 * 1024   # double-buffered slab budget (v7x-safe)
_VMEM_LIMIT_BYTES = 40 * 1024 * 1024       # scoped limit: budget + headroom


def _round_up(x, m):
    return ((x + m - 1) // m) * m


# ----------------------------------------------------------------------------
# Kernels
# ----------------------------------------------------------------------------
def _proj_kernel_nok(x_ref, w_ref, b_ref, o_ref):
    # Full-K path: one MXU dot per output tile, bias fused, no accumulator.
    # x_ref: [tm, D]  f32 (cast to bf16 on the VPU -> bf16 MXU, f32 accumulate)
    # w_ref: [D, tn]  bf16
    # b_ref: [1, tn]  f32
    # o_ref: [tm, tn] f32
    o_ref[...] = (
        jnp.dot(x_ref[...].astype(jnp.bfloat16), w_ref[...],
                preferred_element_type=jnp.float32)
        + b_ref[...]
    )


def _proj_kernel_ktiled(x_ref, w_ref, b_ref, o_ref):
    # K-tiled path.  NOTE: correctness relies on K being the LAST grid axis
    # and on the output BlockSpec returning the same (i, j) block for every k
    # -> o_ref stays resident in VMEM across the reduction, so we accumulate
    # into it directly (no scratch accumulator).
    k = pl.program_id(2)

    @pl.when(k == 0)
    def _init():
        o_ref[...] = jnp.zeros_like(o_ref)

    o_ref[...] += jnp.dot(x_ref[...].astype(jnp.bfloat16), w_ref[...],
                          preferred_element_type=jnp.float32)

    @pl.when(k == pl.num_programs(2) - 1)
    def _finalize():
        o_ref[...] += b_ref[...]   # bias added exactly once


# ----------------------------------------------------------------------------
# Tiling decisions + one-time parameter preparation
# ----------------------------------------------------------------------------
def _pick_tn(o_pad):
    if o_pad <= 512:
        return o_pad               # single lane-dense O tile
    for t in (512, 256, 128):
        if o_pad % t == 0:
            return t
    return _LANE


def _pipeline_bytes(tm, tk, tn):
    # Double-buffered x (f32) + weight (bf16) + bias (f32) + output (f32).
    return 2 * (tm * tk * 4 + tk * tn * 2 + tn * 4 + tm * tn * 4)


def _is_multicore_tc():
    # v7x has 2 TensorCores per chip sharded along "parallel" grid axes.
    try:
        kind = jax.devices()[0].device_kind.lower()
    except Exception:
        return False
    return "v7" in kind or "7x" in kind


def prepare_visual_net_params(weight, bias):
    """Cast + pad the projection parameters ONCE (hoisted out of the forward).

    weight: [C*H*W, output_size] f32, bias: [output_size] f32.
    Returns the bf16 lane-padded weight, the f32 bias row and the static
    tiling decisions, so the per-call path streams each operand exactly once.
    """
    D, O = weight.shape
    o_pad = _round_up(O, _LANE)
    tn = _pick_tn(o_pad)

    # Collapse the K (reduction) axis entirely when the full-K slabs fit the
    # pipeline budget; otherwise pick the largest fitting tk.
    tm_ref = 512                               # conservative bound for M tile
    if _pipeline_bytes(tm_ref, D, tn) <= _VMEM_PIPELINE_BUDGET:
        tk = D
        d_pad = D                              # full-extent block: no padding
    else:
        tk = 256
        for cand in (2048, 1024, 512, 256):
            if _pipeline_bytes(tm_ref, cand, tn) <= _VMEM_PIPELINE_BUDGET:
                tk = cand
                break
        d_pad = _round_up(D, tk)

    w = weight.astype(jnp.bfloat16)
    if (d_pad, o_pad) != (D, O):
        w = jnp.pad(w, ((0, d_pad - D), (0, o_pad - O)))
    b = bias.astype(jnp.float32).reshape(1, O)
    if o_pad != O:
        b = jnp.pad(b, ((0, 0), (0, o_pad - O)))

    return {
        "weight": w,               # [D_pad, O_pad] bf16
        "bias": b,                 # [1, O_pad]     f32
        "in_features": D,
        "out_features": O,
        "tn": tn,
        "tk": tk,
    }


# ----------------------------------------------------------------------------
# Forward
# ----------------------------------------------------------------------------
def visual_net_forward(x, params):
    """VisualNet forward.

    Args:
      x:      [B, N_his, C, H, W] float32 (NCHW frames)
      params: output of prepare_visual_net_params(weight, bias)
    Returns:
      dict with 'dynamics_net_input': [B, N_his, output_size] float32
    """
    B, N_his, C, H, W = x.shape
    D = C * H * W
    assert D == params["in_features"], (D, params["in_features"])
    O = params["out_features"]
    w = params["weight"]
    b = params["bias"]
    tn = params["tn"]
    tk = params["tk"]
    D_pad, O_pad = w.shape
    M = B * N_his

    x2d = x.reshape(M, D)                      # f32; cast to bf16 inside kernel

    # Cover all of M with one tile when possible so the weight (dominant HBM
    # stream) is read exactly once.  A block dim equal to the full array
    # extent is exempt from the (8,128) divisibility rule -> no M padding.
    if M <= 512:
        tm, M_pad = M, M
    else:
        tm = 512
        M_pad = _round_up(M, tm)
        x2d = jnp.pad(x2d, ((0, M_pad - M), (0, 0)))
    if D_pad != D:                             # only on the K-tiled path
        x2d = jnp.pad(x2d, ((0, 0), (0, D_pad - D)))

    m_tiles = M_pad // tm
    n_tiles = O_pad // tn

    # Keep v7x's second TensorCore busy: if the parallel grid collapses to a
    # single tile, shrink tn to 128 (no-op / skipped on 1-TC parts).
    if m_tiles * n_tiles < 2 and tn > _LANE and _is_multicore_tc():
        tn = _LANE
        n_tiles = O_pad // tn

    cost = pl.CostEstimate(
        flops=2 * M_pad * D_pad * O_pad,
        transcendentals=0,
        bytes_accessed=(
            4 * M_pad * D_pad * n_tiles        # x (f32), re-read per O tile
            + 2 * D_pad * O_pad * m_tiles      # weight (bf16), re-read per M tile
            + 4 * (M_pad * O_pad + O_pad)      # output + bias (f32)
        ),
    )

    if tk == D_pad:
        # Fast path: no reduction grid axis, single dot per output tile.
        out2d = pl.pallas_call(
            _proj_kernel_nok,
            out_shape=jax.ShapeDtypeStruct((M_pad, O_pad), jnp.float32),
            grid_spec=pltpu.PrefetchScalarGridSpec(
                num_scalar_prefetch=0,
                grid=(m_tiles, n_tiles),
                in_specs=[
                    pl.BlockSpec((tm, D_pad), lambda i, j: (i, 0)),   # x
                    pl.BlockSpec((D_pad, tn), lambda i, j: (0, j)),   # weight
                    pl.BlockSpec((1, tn), lambda i, j: (0, j)),       # bias
                ],
                out_specs=pl.BlockSpec((tm, tn), lambda i, j: (i, j)),
            ),
            compiler_params=pltpu.CompilerParams(
                dimension_semantics=("parallel", "parallel"),
                vmem_limit_bytes=_VMEM_LIMIT_BYTES,
            ),
            cost_estimate=cost,
        )(x2d, w, b)
    else:
        # K-tiled path for very large D.  K (reduction) is the LAST grid axis.
        out2d = pl.pallas_call(
            _proj_kernel_ktiled,
            out_shape=jax.ShapeDtypeStruct((M_pad, O_pad), jnp.float32),
            grid_spec=pltpu.PrefetchScalarGridSpec(
                num_scalar_prefetch=0,
                grid=(m_tiles, n_tiles, D_pad // tk),
                in_specs=[
                    pl.BlockSpec((tm, tk), lambda i, j, k: (i, k)),   # x
                    pl.BlockSpec((tk, tn), lambda i, j, k: (k, j)),   # weight
                    pl.BlockSpec((1, tn), lambda i, j, k: (0, j)),    # bias
                ],
                out_specs=pl.BlockSpec((tm, tn), lambda i, j, k: (i, j)),
            ),
            compiler_params=pltpu.CompilerParams(
                dimension_semantics=("parallel", "parallel", "arbitrary"),
                vmem_limit_bytes=_VMEM_LIMIT_BYTES,
            ),
            cost_estimate=cost,
        )(x2d, w, b)

    out = out2d[:M, :O].reshape(B, N_his, O)
    return {"dynamics_net_input": out}


if __name__ == "__main__":
    # Small shapes consistent with the documented forward contract.
    B, N_his, C, H, W = 2, 4, 4, 16, 16
    output_size = 32
    D = C * H * W

    key = jax.random.PRNGKey(0)
    kx, kw, kb = jax.random.split(key, 3)

    x = jax.random.normal(kx, (B, N_his, C, H, W), dtype=jnp.float32)
    # Deterministic in-script parameter init (Kaiming-ish scale).
    weight = jax.random.normal(kw, (D, output_size), dtype=jnp.float32) / jnp.sqrt(D)
    bias = jax.random.normal(kb, (output_size,), dtype=jnp.float32) * 0.01

    # Parameters are cast/padded ONCE here (hoisted out of the per-call path).
    params = prepare_visual_net_params(weight, bias)

    out = visual_net_forward(x, params)
    y = jax.block_until_ready(out["dynamics_net_input"])

    assert y.shape == (B, N_his, output_size), y.shape
    assert y.dtype == jnp.float32

    # Reference with the same bf16 operand cast (f32 accumulate) as the kernel.
    x_bf = x.reshape(B * N_his, D).astype(jnp.bfloat16).astype(jnp.float32)
    w_bf = weight.astype(jnp.bfloat16).astype(jnp.float32)
    ref = (x_bf @ w_bf + bias).reshape(B, N_his, output_size)
    assert jnp.allclose(y, ref, atol=2e-2, rtol=2e-2), float(jnp.max(jnp.abs(y - ref)))

    # Sanity-check against the pure-f32 reference at bf16 tolerance.
    ref32 = (x.reshape(B * N_his, D) @ weight + bias).reshape(B, N_his, output_size)
    assert jnp.allclose(y, ref32, atol=5e-2, rtol=5e-2)

    print("KERNEL_OK")
</pallas_src>

<mosaic_0001>
module attributes {stable_mosaic.version = 11 : i64} {
  func.func @_proj_kernel_nok(%arg0: i32, %arg1: i32, %arg2: memref<8x1024xf32, #tpu.memory_space<vmem>>, %arg3: memref<1024x128xbf16, #tpu.memory_space<vmem>>, %arg4: memref<1x128xf32, #tpu.memory_space<vmem>>, %arg5: memref<8x128xf32, #tpu.memory_space<vmem>>) attributes {dimension_semantics = [#tpu.dimension_semantics<parallel>, #tpu.dimension_semantics<parallel>], iteration_bounds = array<i64: 1, 1>, scalar_prefetch = 0 : i64, scratch_operands = 0 : i64, tpu.core_type = #tpu.core_type<tc>, window_params = [{transform_indices = @transform_0, window_bounds = array<i64: 8, 1024>}, {transform_indices = @transform_1, window_bounds = array<i64: 1024, 128>}, {transform_indices = @transform_2, window_bounds = array<i64: 1, 128>}, {transform_indices = @transform_3, window_bounds = array<i64: 8, 128>}]} {
    %c0 = arith.constant 0 : index
    %c0_0 = arith.constant 0 : index
    %0 = vector.load %arg2[%c0, %c0_0] : memref<8x1024xf32, #tpu.memory_space<vmem>>, vector<8x1024xf32>
    %1 = arith.truncf %0 : vector<8x1024xf32> to vector<8x1024xbf16>
    %c0_1 = arith.constant 0 : index
    %c0_2 = arith.constant 0 : index
    %2 = vector.load %arg3[%c0_1, %c0_2] : memref<1024x128xbf16, #tpu.memory_space<vmem>>, vector<1024x128xbf16>
    %cst = arith.constant dense<0.000000e+00> : vector<8x128xf32>
    %3 = tpu.matmul %1, %2, %cst {dimension_numbers = #tpu.dot_dimension_numbers<[1], [0], [0], [1], [0, 0, 1, 1], [], []>} : vector<8x1024xbf16>, vector<1024x128xbf16>, vector<8x128xf32> -> vector<8x128xf32>
    %c0_3 = arith.constant 0 : index
    %c0_4 = arith.constant 0 : index
    %4 = vector.load %arg4[%c0_3, %c0_4] : memref<1x128xf32, #tpu.memory_space<vmem>>, vector<1x128xf32>
    %5 = vector.broadcast %4 : vector<1x128xf32> to vector<8x128xf32>
    %6 = arith.addf %3, %5 : vector<8x128xf32>
    %c0_5 = arith.constant 0 : index
    %c0_6 = arith.constant 0 : index
    %7 = vector.load %arg5[%c0_5, %c0_6] : memref<8x128xf32, #tpu.memory_space<vmem>>, vector<8x128xf32>
    tpu.vector_store %arg5[%c0_5, %c0_6], %6 {strides = array<i32>} : memref<8x128xf32, #tpu.memory_space<vmem>>, vector<8x128xf32>,
    return
  }
  func.func @transform_0(%arg0: i32, %arg1: i32) -> (i32, i32) {
    %c0_i32 = arith.constant 0 : i32
    %c0_i32_0 = arith.constant 0 : i32
    return %arg0, %c0_i32 : i32, i32
  }
  func.func @transform_1(%arg0: i32, %arg1: i32) -> (i32, i32) {
    %c0_i32 = arith.constant 0 : i32
    %c0_i32_0 = arith.constant 0 : i32
    return %c0_i32, %arg1 : i32, i32
  }
  func.func @transform_2(%arg0: i32, %arg1: i32) -> (i32, i32) {
    %c0_i32 = arith.constant 0 : i32
    %c0_i32_0 = arith.constant 0 : i32
    return %c0_i32, %arg1 : i32, i32
  }
  func.func @transform_3(%arg0: i32, %arg1: i32) -> (i32, i32) {
    %c0_i32 = arith.constant 0 : i32
    return %arg0, %arg1 : i32, i32
  }
}

</mosaic_0001>

<llo_original>
// kernel: tpu_custom_call.1
$region0: #{tpu_custom_call.1}
  #allocation0 [shape = 'u32[]', space=smem, size = 0x4, offset = 0x4, fixed_abs, tag = 'smem constant byte address 0x4 - core index']
  #allocation1 [shape = 'u32[144,128]{1,0:T(1,128)}', space=vmem, size = 0x12000, scoped, tag = 'internal scratch']
  %s0 = inlined_call_operand.hbm [shape: f32[8,1024], index: 0, kind: input, shape index: {}]
  %s1 = inlined_call_operand.hbm [shape: bf16[1024,128], index: 1, kind: input, shape index: {}]
  %s2 = inlined_call_operand.vmem [shape: f32[1,128], index: 2, kind: input, shape index: {}]
  %s3 = inlined_call_operand.hbm [shape: f32[8,128], index: 3, kind: output, shape index: {}]
  %s4 = sld [smem:[#allocation0]]
  $region30: #{tpu_custom_call.1} parent=0
    _
  %s6 = ssub.s32 1, %s4
  %s7 = scalar_select 0, %s6, %s4
  $region1: #{tpu_custom_call.1} parent=0
    #allocation2 [shape = 'u8[32768]{0}', space=vmem, size = 0x8000, scoped, tag = 'input window, operand 0, single buffered']
    #allocation3 [shape = 's32[1]{0}', space=sflag, size = 0x4, scoped, tag = 'scoped memory for tpu_custom_call.1']
    #allocation4 [shape = 's32[1]{0}', space=sflag, size = 0x4, scoped, tag = 'scoped memory for tpu_custom_call.1']
    #allocation5 [shape = 'u8[262144]{0}', space=vmem, size = 0x40000, scoped, tag = 'input window, operand 1, single buffered']
    #allocation6 [shape = 's32[1]{0}', space=sflag, size = 0x4, scoped, tag = 'scoped memory for tpu_custom_call.1']
    #allocation7 [shape = 'u8[4096]{0}', space=vmem, size = 0x1000, scoped, tag = 'output window, operand 0, single buffered']
    %8 = vsyncpa [#allocation3], 0
    %9 = vsyncpa [#allocation6], 0
    %10 = vsyncpa [#allocation4], 0
    // Predicated region
    $region2: #{tpu_custom_call.1} parent=1 // pred_check
      _
    $region3: #{tpu_custom_call.1} parent=1 // pred_check_branch
      %12 = sbr.rel (0) target = $region5
    $region4: #{tpu_custom_call.1} parent=1 // pred_region
      %s14 = ssub.s32 1024, 1024
      %15 = vsyncadd [#allocation3], %s14
      %s17 = sshll.u32 [#allocation2], 4
      %s18 = int_to_ptr.vmem [resolvable:$true] %s17
      %20 = dma.hbm_to_vmem [thread:$0]  %s0, 1024, %s18, [#allocation3]
    $region5: #{tpu_custom_call.1} parent=1 // pred_fallthru
      _
    // Predicated region
    $region6: #{tpu_custom_call.1} parent=1 // pred_check
      _
    $region7: #{tpu_custom_call.1} parent=1 // pred_check_branch
      %22 = sbr.rel (0) target = $region9
    $region8: #{tpu_custom_call.1} parent=1 // pred_region
      %s24 = ssub.s32 8192, 8192
      %25 = vsyncadd [#allocation6], %s24
      %s26 = sshll.u32 [#allocation5], 4
      %s27 = int_to_ptr.vmem [resolvable:$true] %s26
      %32 = dma.hbm_to_vmem [thread:$0]  %s1, 8192, %s27, [#allocation6], 64, 64, 4
    $region9: #{tpu_custom_call.1} parent=1 // pred_fallthru
      _
    // Predicated region
    $region10: #{tpu_custom_call.1} parent=1 // pred_check
      _
    $region11: #{tpu_custom_call.1} parent=1 // pred_check_branch
      %34 = sbr.rel (0) target = $region13
    $region12: #{tpu_custom_call.1} parent=1 // pred_region
      _
    $region13: #{tpu_custom_call.1} parent=1 // pred_fallthru
      _
    // Predicated region
    $region14: #{tpu_custom_call.1} parent=1 // pred_check
      _
    $region15: #{tpu_custom_call.1} parent=1 // pred_check_branch
      %36 = sbr.rel (0) target = $region17
    $region16: #{tpu_custom_call.1} parent=1 // pred_region
      %37 = dma.done [#allocation3], 1024
    $region17: #{tpu_custom_call.1} parent=1 // pred_fallthru
      _
    // Predicated region
    $region18: #{tpu_custom_call.1} parent=1 // pred_check
      _
    $region19: #{tpu_custom_call.1} parent=1 // pred_check_branch
      %39 = sbr.rel (0) target = $region21
    $region20: #{tpu_custom_call.1} parent=1 // pred_region
      %40 = dma.done [#allocation6], 8192
    $region21: #{tpu_custom_call.1} parent=1 // pred_fallthru
      _
    %v42 = vld [vmem:[#allocation2] sm:$0xff]
    %v43 = vld [vmem:[#allocation2 + $0x8] sm:$0xff]
    %v44 = vld [vmem:[#allocation2 + $0x10] sm:$0xff]
    %v45 = vld [vmem:[#allocation2 + $0x18] sm:$0xff]
    %v46 = vld [vmem:[#allocation2 + $0x20] sm:$0xff]
    %v47 = vld [vmem:[#allocation2 + $0x28] sm:$0xff]
    %v48 = vld [vmem:[#allocation2 + $0x30] sm:$0xff]
    %v49 = vld [vmem:[#allocation2 + $0x38] sm:$0xff]
    %v50 = vpack.c.bf16 %v42, %v42
    %v51 = vpack.c.bf16 %v43, %v43
    %v52 = vpack.c.bf16 %v44, %v44
    %v53 = vpack.c.bf16 %v45, %v45
    %v54 = vpack.c.bf16 %v46, %v46
    %v55 = vpack.c.bf16 %v47, %v47
    %v56 = vpack.c.bf16 %v48, %v48
    %v57 = vpack.c.bf16 %v49, %v49
    %v58 = vld [vmem:[#allocation5] sm:$0xf]
    %v59 = vld [vmem:[#allocation5 + $0x4] sm:$0xf]
    %v60 = vld [vmem:[#allocation5 + $0x8] sm:$0xf]
    %v61 = vld [vmem:[#allocation5 + $0xc] sm:$0xf]
    %v62 = vld [vmem:[#allocation5 + $0x10] sm:$0xf]
    %v63 = vld [vmem:[#allocation5 + $0x14] sm:$0xf]
    %v64 = vld [vmem:[#allocation5 + $0x18] sm:$0xf]
    %v65 = vld [vmem:[#allocation5 + $0x1c] sm:$0xf]
    %v66 = vld [vmem:[#allocation5 + $0x20] sm:$0xf]
    %v67 = vld [vmem:[#allocation5 + $0x24] sm:$0xf]
    %v68 = vld [vmem:[#allocation5 + $0x28] sm:$0xf]
    %v69 = vld [vmem:[#allocation5 + $0x2c] sm:$0xf]
    %v70 = vld [vmem:[#allocation5 + $0x30] sm:$0xf]
    %v71 = vld [vmem:[#allocation5 + $0x34] sm:$0xf]
    %v72 = vld [vmem:[#allocation5 + $0x38] sm:$0xf]
    %v73 = vld [vmem:[#allocation5 + $0x3c] sm:$0xf]
    %v74 = vld [vmem:[#allocation5 + $0x40] sm:$0xf]
    %v75 = vld [vmem:[#allocation5 + $0x44] sm:$0xf]
    %v76 = vld [vmem:[#allocation5 + $0x48] sm:$0xf]
    %v77 = vld [vmem:[#allocation5 + $0x4c] sm:$0xf]
    %v78 = vld [vmem:[#allocation5 + $0x50] sm:$0xf]
    %v79 = vld [vmem:[#allocation5 + $0x54] sm:$0xf]
    %v80 = vld [vmem:[#allocation5 + $0x58] sm:$0xf]
    %v81 = vld [vmem:[#allocation5 + $0x5c] sm:$0xf]
    %v82 = vld [vmem:[#allocation5 + $0x60] sm:$0xf]
    %v83 = vld [vmem:[#allocation5 + $0x64] sm:$0xf]
    %v84 = vld [vmem:[#allocation5 + $0x68] sm:$0xf]
    %v85 = vld [vmem:[#allocation5 + $0x6c] sm:$0xf]
    %v86 = vld [vmem:[#allocation5 + $0x70] sm:$0xf]
    %v87 = vld [vmem:[#allocation5 + $0x74] sm:$0xf]
    %v88 = vld [vmem:[#allocation5 + $0x78] sm:$0xf]
    %v89 = vld [vmem:[#allocation5 + $0x7c] sm:$0xf]
    %v90 = vld [vmem:[#allocation5 + $0x80] sm:$0xf]
    %v91 = vld [vmem:[#allocation5 + $0x84] sm:$0xf]
    %v92 = vld [vmem:[#allocation5 + $0x88] sm:$0xf]
    %v93 = vld [vmem:[#allocation5 + $0x8c] sm:$0xf]
    %v94 = vld [vmem:[#allocation5 + $0x90] sm:$0xf]
    %v95 = vld [vmem:[#allocation5 + $0x94] sm:$0xf]
    %v96 = vld [vmem:[#allocation5 + $0x98] sm:$0xf]
    %v97 = vld [vmem:[#allocation5 + $0x9c] sm:$0xf]
    %v98 = vld [vmem:[#allocation5 + $0xa0] sm:$0xf]
    %v99 = vld [vmem:[#allocation5 + $0xa4] sm:$0xf]
    %v100 = vld [vmem:[#allocation5 + $0xa8] sm:$0xf]
    %v101 = vld [vmem:[#allocation5 + $0xac] sm:$0xf]
    %v102 = vld [vmem:[#allocation5 + $0xb0] sm:$0xf]
    %v103 = vld [vmem:[#allocation5 + $0xb4] sm:$0xf]
    %v104 = vld [vmem:[#allocation5 + $0xb8] sm:$0xf]
    %v105 = vld [vmem:[#allocation5 + $0xbc] sm:$0xf]
    %v106 = vld [vmem:[#allocation5 + $0xc0] sm:$0xf]
    %v107 = vld [vmem:[#allocation5 + $0xc4] sm:$0xf]
    %v108 = vld [vmem:[#allocation5 + $0xc8] sm:$0xf]
    %v109 = vld [vmem:[#allocation5 + $0xcc] sm:$0xf]
    %v110 = vld [vmem:[#allocation5 + $0xd0] sm:$0xf]
    %v111 = vld [vmem:[#allocation5 + $0xd4] sm:$0xf]
    %v112 = vld [vmem:[#allocation5 + $0xd8] sm:$0xf]
    %v113 = vld [vmem:[#allocation5 + $0xdc] sm:$0xf]
    %v114 = vld [vmem:[#allocation5 + $0xe0] sm:$0xf]
    %v115 = vld [vmem:[#allocation5 + $0xe4] sm:$0xf]
    %v116 = vld [vmem:[#allocation5 + $0xe8] sm:$0xf]
    %v117 = vld [vmem:[#allocation5 + $0xec] sm:$0xf]
    %v118 = vld [vmem:[#allocation5 + $0xf0] sm:$0xf]
    %v119 = vld [vmem:[#allocation5 + $0xf4] sm:$0xf]
    %v120 = vld [vmem:[#allocation5 + $0xf8] sm:$0xf]
    %v121 = vld [vmem:[#allocation5 + $0xfc] sm:$0xf]
    %v122 = vld [vmem:[#allocation5 + $0x100] sm:$0xf]
    %v123 = vld [vmem:[#allocation5 + $0x104] sm:$0xf]
    %v124 = vld [vmem:[#allocation5 + $0x108] sm:$0xf]
    %v125 = vld [vmem:[#allocation5 + $0x10c] sm:$0xf]
    %v126 = vld [vmem:[#allocation5 + $0x110] sm:$0xf]
    %v127 = vld [vmem:[#allocation5 + $0x114] sm:$0xf]
    %v128 = vld [vmem:[#allocation5 + $0x118] sm:$0xf]
    %v129 = vld [vmem:[#allocation5 + $0x11c] sm:$0xf]
    %v130 = vld [vmem:[#allocation5 + $0x120] sm:$0xf]
    %v131 = vld [vmem:[#allocation5 + $0x124] sm:$0xf]
    %v132 = vld [vmem:[#allocation5 + $0x128] sm:$0xf]
    %v133 = vld [vmem:[#allocation5 + $0x12c] sm:$0xf]
    %v134 = vld [vmem:[#allocation5 + $0x130] sm:$0xf]
    %v135 = vld [vmem:[#allocation5 + $0x134] sm:$0xf]
    %v136 = vld [vmem:[#allocation5 + $0x138] sm:$0xf]
    %v137 = vld [vmem:[#allocation5 + $0x13c] sm:$0xf]
    %v138 = vld [vmem:[#allocation5 + $0x140] sm:$0xf]
    %v139 = vld [vmem:[#allocation5 + $0x144] sm:$0xf]
    %v140 = vld [vmem:[#allocation5 + $0x148] sm:$0xf]
    %v141 = vld [vmem:[#allocation5 + $0x14c] sm:$0xf]
    %v142 = vld [vmem:[#allocation5 + $0x150] sm:$0xf]
    %v143 = vld [vmem:[#allocation5 + $0x154] sm:$0xf]
    %v144 = vld [vmem:[#allocation5 + $0x158] sm:$0xf]
    %v145 = vld [vmem:[#allocation5 + $0x15c] sm:$0xf]
    %v146 = vld [vmem:[#allocation5 + $0x160] sm:$0xf]
    %v147 = vld [vmem:[#allocation5 + $0x164] sm:$0xf]
    %v148 = vld [vmem:[#allocation5 + $0x168] sm:$0xf]
    %v149 = vld [vmem:[#allocation5 + $0x16c] sm:$0xf]
    %v150 = vld [vmem:[#allocation5 + $0x170] sm:$0xf]
    %v151 = vld [vmem:[#allocation5 + $0x174] sm:$0xf]
    %v152 = vld [vmem:[#allocation5 + $0x178] sm:$0xf]
    %v153 = vld [vmem:[#allocation5 + $0x17c] sm:$0xf]
    %v154 = vld [vmem:[#allocation5 + $0x180] sm:$0xf]
    %v155 = vld [vmem:[#allocation5 + $0x184] sm:$0xf]
    %v156 = vld [vmem:[#allocation5 + $0x188] sm:$0xf]
    %v157 = vld [vmem:[#allocation5 + $0x18c] sm:$0xf]
    %v158 = vld [vmem:[#allocation5 + $0x190] sm:$0xf]
    %v159 = vld [vmem:[#allocation5 + $0x194] sm:$0xf]
    %v160 = vld [vmem:[#allocation5 + $0x198] sm:$0xf]
    %v161 = vld [vmem:[#allocation5 + $0x19c] sm:$0xf]
    %v162 = vld [vmem:[#allocation5 + $0x1a0] sm:$0xf]
    %v163 = vld [vmem:[#allocation5 + $0x1a4] sm:$0xf]
    %v164 = vld [vmem:[#allocation5 + $0x1a8] sm:$0xf]
    %v165 = vld [vmem:[#allocation5 + $0x1ac] sm:$0xf]
    %v166 = vld [vmem:[#allocation5 + $0x1b0] sm:$0xf]
    %v167 = vld [vmem:[#allocation5 + $0x1b4] sm:$0xf]
    %v168 = vld [vmem:[#allocation5 + $0x1b8] sm:$0xf]
    %v169 = vld [vmem:[#allocation5 + $0x1bc] sm:$0xf]
    %v170 = vld [vmem:[#allocation5 + $0x1c0] sm:$0xf]
    %v171 = vld [vmem:[#allocation5 + $0x1c4] sm:$0xf]
    %v172 = vld [vmem:[#allocation5 + $0x1c8] sm:$0xf]
    %v173 = vld [vmem:[#allocation5 + $0x1cc] sm:$0xf]
    %v174 = vld [vmem:[#allocation5 + $0x1d0] sm:$0xf]
    %v175 = vld [vmem:[#allocation5 + $0x1d4] sm:$0xf]
    %v176 = vld [vmem:[#allocation5 + $0x1d8] sm:$0xf]
    %v177 = vld [vmem:[#allocation5 + $0x1dc] sm:$0xf]
    %v178 = vld [vmem:[#allocation5 + $0x1e0] sm:$0xf]
    %v179 = vld [vmem:[#allocation5 + $0x1e4] sm:$0xf]
    %v180 = vld [vmem:[#allocation5 + $0x1e8] sm:$0xf]
    %v181 = vld [vmem:[#allocation5 + $0x1ec] sm:$0xf]
    %v182 = vld [vmem:[#allocation5 + $0x1f0] sm:$0xf]
    %v183 = vld [vmem:[#allocation5 + $0x1f4] sm:$0xf]
    %v184 = vld [vmem:[#allocation5 + $0x1f8] sm:$0xf]
    %v185 = vld [vmem:[#allocation5 + $0x1fc] sm:$0xf]
    %v186 = vld [vmem:[%s2] sm:$0x1]
    %v188 = vlaneseq
    %v189 = vshrl.u32 %v188, 7
    %v190 = vsub.s32 0, %v189
    %v191 = vrot.slane %v186, %v190
    %v321 = vunpack.c.l.b16 %v58
    %v322 = vunpack.c.l.b16 %v59
    %v323 = vunpack.c.l.b16 %v60
    %v324 = vunpack.c.l.b16 %v61
    %v325 = vunpack.c.l.b16 %v62
    %v326 = vunpack.c.l.b16 %v63
    %v327 = vunpack.c.l.b16 %v64
    %v328 = vunpack.c.l.b16 %v65
    %v329 = vunpack.c.l.b16 %v66
    %v330 = vunpack.c.l.b16 %v67
    %v331 = vunpack.c.l.b16 %v68
    %v332 = vunpack.c.l.b16 %v69
    %v333 = vunpack.c.l.b16 %v70
    %v334 = vunpack.c.l.b16 %v71
    %v335 = vunpack.c.l.b16 %v72
    %v336 = vunpack.c.l.b16 %v73
    %v337 = vunpack.c.l.b16 %v74
    %v338 = vunpack.c.l.b16 %v75
    %v339 = vunpack.c.l.b16 %v76
    %v340 = vunpack.c.l.b16 %v77
    %v341 = vunpack.c.l.b16 %v78
    %v342 = vunpack.c.l.b16 %v79
    %v343 = vunpack.c.l.b16 %v80
    %v344 = vunpack.c.l.b16 %v81
    %v345 = vunpack.c.l.b16 %v82
    %v346 = vunpack.c.l.b16 %v83
    %v347 = vunpack.c.l.b16 %v84
    %v348 = vunpack.c.l.b16 %v85
    %v349 = vunpack.c.l.b16 %v86
    %v350 = vunpack.c.l.b16 %v87
    %v351 = vunpack.c.l.b16 %v88
    %v352 = vunpack.c.l.b16 %v89
    %v353 = vunpack.c.l.b16 %v90
    %v354 = vunpack.c.l.b16 %v91
    %v355 = vunpack.c.l.b16 %v92
    %v356 = vunpack.c.l.b16 %v93
    %v357 = vunpack.c.l.b16 %v94
    %v358 = vunpack.c.l.b16 %v95
    %v359 = vunpack.c.l.b16 %v96
    %v360 = vunpack.c.l.b16 %v97
    %v361 = vunpack.c.l.b16 %v98
    %v362 = vunpack.c.l.b16 %v99
    %v363 = vunpack.c.l.b16 %v100
    %v364 = vunpack.c.l.b16 %v101
    %v365 = vunpack.c.l.b16 %v102
    %v366 = vunpack.c.l.b16 %v103
    %v367 = vunpack.c.l.b16 %v104
    %v368 = vunpack.c.l.b16 %v105
    %v369 = vunpack.c.l.b16 %v106
    %v370 = vunpack.c.l.b16 %v107
    %v371 = vunpack.c.l.b16 %v108
    %v372 = vunpack.c.l.b16 %v109
    %v373 = vunpack.c.l.b16 %v110
    %v374 = vunpack.c.l.b16 %v111
    %v375 = vunpack.c.l.b16 %v112
    %v376 = vunpack.c.l.b16 %v113
    %v377 = vunpack.c.l.b16 %v114
    %v378 = vunpack.c.l.b16 %v115
    %v379 = vunpack.c.l.b16 %v116
    %v380 = vunpack.c.l.b16 %v117
    %v381 = vunpack.c.l.b16 %v118
    %v382 = vunpack.c.l.b16 %v119
    %v383 = vunpack.c.l.b16 %v120
    %v384 = vunpack.c.l.b16 %v121
    %v385 = vunpack.c.l.b16 %v122
    %v386 = vunpack.c.l.b16 %v123
    %v387 = vunpack.c.l.b16 %v124
    %v388 = vunpack.c.l.b16 %v125
    %v389 = vunpack.c.l.b16 %v126
    %v390 = vunpack.c.l.b16 %v127
    %v391 = vunpack.c.l.b16 %v128
    %v392 = vunpack.c.l.b16 %v129
    %v393 = vunpack.c.l.b16 %v130
    %v394 = vunpack.c.l.b16 %v131
    %v395 = vunpack.c.l.b16 %v132
    %v396 = vunpack.c.l.b16 %v133
    %v397 = vunpack.c.l.b16 %v134
    %v398 = vunpack.c.l.b16 %v135
    %v399 = vunpack.c.l.b16 %v136
    %v400 = vunpack.c.l.b16 %v137
    %v401 = vunpack.c.l.b16 %v138
    %v402 = vunpack.c.l.b16 %v139
    %v403 = vunpack.c.l.b16 %v140
    %v404 = vunpack.c.l.b16 %v141
    %v405 = vunpack.c.l.b16 %v142
    %v406 = vunpack.c.l.b16 %v143
    %v407 = vunpack.c.l.b16 %v144
    %v408 = vunpack.c.l.b16 %v145
    %v409 = vunpack.c.l.b16 %v146
    %v410 = vunpack.c.l.b16 %v147
    %v411 = vunpack.c.l.b16 %v148
    %v412 = vunpack.c.l.b16 %v149
    %v413 = vunpack.c.l.b16 %v150
    %v414 = vunpack.c.l.b16 %v151
    %v415 = vunpack.c.l.b16 %v152
    %v416 = vunpack.c.l.b16 %v153
    %v417 = vunpack.c.l.b16 %v154
    %v418 = vunpack.c.l.b16 %v155
    %v419 = vunpack.c.l.b16 %v156
    %v420 = vunpack.c.l.b16 %v157
    %v421 = vunpack.c.l.b16 %v158
    %v422 = vunpack.c.l.b16 %v159
    %v423 = vunpack.c.l.b16 %v160
    %v424 = vunpack.c.l.b16 %v161
    %v425 = vunpack.c.l.b16 %v162
    %v426 = vunpack.c.l.b16 %v163
    %v427 = vunpack.c.l.b16 %v164
    %v428 = vunpack.c.l.b16 %v165
    %v429 = vunpack.c.l.b16 %v166
    %v430 = vunpack.c.l.b16 %v167
    %v431 = vunpack.c.l.b16 %v168
    %v432 = vunpack.c.l.b16 %v169
    %v433 = vunpack.c.l.b16 %v170
    %v434 = vunpack.c.l.b16 %v171
    %v435 = vunpack.c.l.b16 %v172
    %v436 = vunpack.c.l.b16 %v173
    %v437 = vunpack.c.l.b16 %v174
    %v438 = vunpack.c.l.b16 %v175
    %v439 = vunpack.c.l.b16 %v176
    %v440 = vunpack.c.l.b16 %v177
    %v441 = vunpack.c.l.b16 %v178
    %v442 = vunpack.c.l.b16 %v179
    %v443 = vunpack.c.l.b16 %v180
    %v444 = vunpack.c.l.b16 %v181
    %v445 = vunpack.c.l.b16 %v182
    %v446 = vunpack.c.l.b16 %v183
    %v447 = vunpack.c.l.b16 %v184
    %v448 = vunpack.c.l.b16 %v185
    %v449 = vpack.c.b16 %v322, %v321
    %v450 = vpack.c.b16 %v324, %v323
    %v451 = vpack.c.b16 %v326, %v325
    %v452 = vpack.c.b16 %v328, %v327
    %v453 = vpack.c.b16 %v330, %v329
    %v454 = vpack.c.b16 %v332, %v331
    %v455 = vpack.c.b16 %v334, %v333
    %v456 = vpack.c.b16 %v336, %v335
    %v457 = vpack.c.b16 %v338, %v337
    %v458 = vpack.c.b16 %v340, %v339
    %v459 = vpack.c.b16 %v342, %v341
    %v460 = vpack.c.b16 %v344, %v343
    %v461 = vpack.c.b16 %v346, %v345
    %v462 = vpack.c.b16 %v348, %v347
    %v463 = vpack.c.b16 %v350, %v349
    %v464 = vpack.c.b16 %v352, %v351
    %v465 = vpack.c.b16 %v354, %v353
    %v466 = vpack.c.b16 %v356, %v355
    %v467 = vpack.c.b16 %v358, %v357
    %v468 = vpack.c.b16 %v360, %v359
    %v469 = vpack.c.b16 %v362, %v361
    %v470 = vpack.c.b16 %v364, %v363
    %v471 = vpack.c.b16 %v366, %v365
    %v472 = vpack.c.b16 %v368, %v367
    %v473 = vpack.c.b16 %v370, %v369
    %v474 = vpack.c.b16 %v372, %v371
    %v475 = vpack.c.b16 %v374, %v373
    %v476 = vpack.c.b16 %v376, %v375
    %v477 = vpack.c.b16 %v378, %v377
    %v478 = vpack.c.b16 %v380, %v379
    %v479 = vpack.c.b16 %v382, %v381
    %v480 = vpack.c.b16 %v384, %v383
    %v481 = vpack.c.b16 %v386, %v385
    %v482 = vpack.c.b16 %v388, %v387
    %v483 = vpack.c.b16 %v390, %v389
    %v484 = vpack.c.b16 %v392, %v391
    %v485 = vpack.c.b16 %v394, %v393
    %v486 = vpack.c.b16 %v396, %v395
    %v487 = vpack.c.b16 %v398, %v397
    %v488 = vpack.c.b16 %v400, %v399
    %v489 = vpack.c.b16 %v402, %v401
    %v490 = vpack.c.b16 %v404, %v403
    %v491 = vpack.c.b16 %v406, %v405
    %v492 = vpack.c.b16 %v408, %v407
    %v493 = vpack.c.b16 %v410, %v409
    %v494 = vpack.c.b16 %v412, %v411
    %v495 = vpack.c.b16 %v414, %v413
    %v496 = vpack.c.b16 %v416, %v415
    %v497 = vpack.c.b16 %v418, %v417
    %v498 = vpack.c.b16 %v420, %v419
    %v499 = vpack.c.b16 %v422, %v421
    %v500 = vpack.c.b16 %v424, %v423
    %v501 = vpack.c.b16 %v426, %v425
    %v502 = vpack.c.b16 %v428, %v427
    %v503 = vpack.c.b16 %v430, %v429
    %v504 = vpack.c.b16 %v432, %v431
    %v505 = vpack.c.b16 %v434, %v433
    %v506 = vpack.c.b16 %v436, %v435
    %v507 = vpack.c.b16 %v438, %v437
    %v508 = vpack.c.b16 %v440, %v439
    %v509 = vpack.c.b16 %v442, %v441
    %v510 = vpack.c.b16 %v444, %v443
    %v511 = vpack.c.b16 %v446, %v445
    %v512 = vpack.c.b16 %v448, %v447
    %577 = vmatprep.subr.bf16.mxu0 0
    %578 = vmatpush1.bf16.msra.mxu0 %v449
    %579 = vmatprep.subr.bf16.mxu0 0
    %580 = vmatpush1.bf16.msra.mxu0 %v450
    %581 = vmatprep.subr.bf16.mxu0 0
    %582 = vmatpush1.bf16.msra.mxu0 %v451
    %583 = vmatprep.subr.bf16.mxu0 0
    %584 = vmatpush1.bf16.msra.mxu0 %v452
    %585 = vmatprep.subr.bf16.mxu0 0
    %586 = vmatpush1.bf16.msra.mxu0 %v453
    %587 = vmatprep.subr.bf16.mxu0 0
    %588 = vmatpush1.bf16.msra.mxu0 %v454
    %589 = vmatprep.subr.bf16.mxu0 0
    %590 = vmatpush1.bf16.msra.mxu0 %v455
    %591 = vmatprep.subr.bf16.mxu0 0
    %592 = vmatpush1.bf16.msra.mxu0 %v456
    %593 = vmatprep.subr.bf16.mxu0 0
    %594 = vmatpush1.bf16.msra.mxu0 %v457
    %595 = vmatprep.subr.bf16.mxu0 0
    %596 = vmatpush1.bf16.msra.mxu0 %v458
    %597 = vmatprep.subr.bf16.mxu0 0
    %598 = vmatpush1.bf16.msra.mxu0 %v459
    %599 = vmatprep.subr.bf16.mxu0 0
    %600 = vmatpush1.bf16.msra.mxu0 %v460
    %601 = vmatprep.subr.bf16.mxu0 0
    %602 = vmatpush1.bf16.msra.mxu0 %v461
    %603 = vmatprep.subr.bf16.mxu0 0
    %604 = vmatpush1.bf16.msra.mxu0 %v462
    %605 = vmatprep.subr.bf16.mxu0 0
    %606 = vmatpush1.bf16.msra.mxu0 %v463
    %607 = vmatprep.subr.bf16.mxu0 0
    %608 = vmatpush1.bf16.msra.mxu0 %v464
    %609 = vmatprep.mubr.bf16.mxu0 %v51
    %610 = vmatmul.mubr.bf16.gmra.mrb[0].mxu0 %v50
    %v611 = vpop.f32.mrb[0].mxu0
    %v612 = vadd.f32 %v191, %v611
    %v613 = vpop.f32.mrb[0].mxu0
    %v614 = vpop.f32.mrb[0].mxu0
    %v615 = vpop.f32.mrb[0].mxu0
    %616 = vdwg.mxu0
    %617 = vmatprep.subr.bf16.mxu0 0
    %618 = vmatpush1.bf16.msra.mxu0 %v465
    %619 = vmatprep.subr.bf16.mxu0 0
    %620 = vmatpush1.bf16.msra.mxu0 %v466
    %621 = vmatprep.subr.bf16.mxu0 0
    %622 = vmatpush1.bf16.msra.mxu0 %v467
    %623 = vmatprep.subr.bf16.mxu0 0
    %624 = vmatpush1.bf16.msra.mxu0 %v468
    %625 = vmatprep.subr.bf16.mxu0 0
    %626 = vmatpush1.bf16.msra.mxu0 %v469
    %627 = vmatprep.subr.bf16.mxu0 0
    %628 = vmatpush1.bf16.msra.mxu0 %v470
    %629 = vmatprep.subr.bf16.mxu0 0
    %630 = vmatpush1.bf16.msra.mxu0 %v471
    %631 = vmatprep.subr.bf16.mxu0 0
    %632 = vmatpush1.bf16.msra.mxu0 %v472
    %633 = vmatprep.subr.bf16.mxu0 0
    %634 = vmatpush1.bf16.msra.mxu0 %v473
    %635 = vmatprep.subr.bf16.mxu0 0
    %636 = vmatpush1.bf16.msra.mxu0 %v474
    %637 = vmatprep.subr.bf16.mxu0 0
    %638 = vmatpush1.bf16.msra.mxu0 %v475
    %639 = vmatprep.subr.bf16.mxu0 0
    %640 = vmatpush1.bf16.msra.mxu0 %v476
    %641 = vmatprep.subr.bf16.mxu0 0
    %642 = vmatpush1.bf16.msra.mxu0 %v477
    %643 = vmatprep.subr.bf16.mxu0 0
    %644 = vmatpush1.bf16.msra.mxu0 %v478
    %645 = vmatprep.subr.bf16.mxu0 0
    %646 = vmatpush1.bf16.msra.mxu0 %v479
    %647 = vmatprep.subr.bf16.mxu0 0
    %648 = vmatpush1.bf16.msra.mxu0 %v480
    %649 = vmatprep.mubr.bf16.mxu0 %v53
    %650 = vmatmul.mubr.bf16.gmra.mrb[0].mxu0 %v52
    %v651 = vpop.f32.mrb[0].mxu0
    %v652 = vadd.f32 %v612, %v651
    %v653 = vpop.f32.mrb[0].mxu0
    %v654 = vpop.f32.mrb[0].mxu0
    %v655 = vpop.f32.mrb[0].mxu0
    %656 = vdwg.mxu0
    %657 = vmatprep.subr.bf16.mxu0 0
    %658 = vmatpush1.bf16.msra.mxu0 %v481
    %659 = vmatprep.subr.bf16.mxu0 0
    %660 = vmatpush1.bf16.msra.mxu0 %v482
    %661 = vmatprep.subr.bf16.mxu0 0
    %662 = vmatpush1.bf16.msra.mxu0 %v483
    %663 = vmatprep.subr.bf16.mxu0 0
    %664 = vmatpush1.bf16.msra.mxu0 %v484
    %665 = vmatprep.subr.bf16.mxu0 0
    %666 = vmatpush1.bf16.msra.mxu0 %v485
    %667 = vmatprep.subr.bf16.mxu0 0
    %668 = vmatpush1.bf16.msra.mxu0 %v486
    %669 = vmatprep.subr.bf16.mxu0 0
    %670 = vmatpush1.bf16.msra.mxu0 %v487
    %671 = vmatprep.subr.bf16.mxu0 0
    %672 = vmatpush1.bf16.msra.mxu0 %v488
    %673 = vmatprep.subr.bf16.mxu0 0
    %674 = vmatpush1.bf16.msra.mxu0 %v489
    %675 = vmatprep.subr.bf16.mxu0 0
    %676 = vmatpush1.bf16.msra.mxu0 %v490
    %677 = vmatprep.subr.bf16.mxu0 0
    %678 = vmatpush1.bf16.msra.mxu0 %v491
    %679 = vmatprep.subr.bf16.mxu0 0
    %680 = vmatpush1.bf16.msra.mxu0 %v492
    %681 = vmatprep.subr.bf16.mxu0 0
    %682 = vmatpush1.bf16.msra.mxu0 %v493
    %683 = vmatprep.subr.bf16.mxu0 0
    %684 = vmatpush1.bf16.msra.mxu0 %v494
    %685 = vmatprep.subr.bf16.mxu0 0
    %686 = vmatpush1.bf16.msra.mxu0 %v495
    %687 = vmatprep.subr.bf16.mxu0 0
    %688 = vmatpush1.bf16.msra.mxu0 %v496
    %689 = vmatprep.mubr.bf16.mxu0 %v55
    %690 = vmatmul.mubr.bf16.gmra.mrb[0].mxu0 %v54
    %v691 = vpop.f32.mrb[0].mxu0
    %v692 = vadd.f32 %v652, %v691
    %v693 = vpop.f32.mrb[0].mxu0
    %v694 = vpop.f32.mrb[0].mxu0
    %v695 = vpop.f32.mrb[0].mxu0
    %696 = vdwg.mxu0
    %697 = vmatprep.subr.bf16.mxu0 0
    %698 = vmatpush1.bf16.msra.mxu0 %v497
    %699 = vmatprep.subr.bf16.mxu0 0
    %700 = vmatpush1.bf16.msra.mxu0 %v498
    %701 = vmatprep.subr.bf16.mxu0 0
    %702 = vmatpush1.bf16.msra.mxu0 %v499
    %703 = vmatprep.subr.bf16.mxu0 0
    %704 = vmatpush1.bf16.msra.mxu0 %v500
    %705 = vmatprep.subr.bf16.mxu0 0
    %706 = vmatpush1.bf16.msra.mxu0 %v501
    %707 = vmatprep.subr.bf16.mxu0 0
    %708 = vmatpush1.bf16.msra.mxu0 %v502
    %709 = vmatprep.subr.bf16.mxu0 0
    %710 = vmatpush1.bf16.msra.mxu0 %v503
    %711 = vmatprep.subr.bf16.mxu0 0
    %712 = vmatpush1.bf16.msra.mxu0 %v504
    %713 = vmatprep.subr.bf16.mxu0 0
    %714 = vmatpush1.bf16.msra.mxu0 %v505
    %715 = vmatprep.subr.bf16.mxu0 0
    %716 = vmatpush1.bf16.msra.mxu0 %v506
    %717 = vmatprep.subr.bf16.mxu0 0
    %718 = vmatpush1.bf16.msra.mxu0 %v507
    %719 = vmatprep.subr.bf16.mxu0 0
    %720 = vmatpush1.bf16.msra.mxu0 %v508
    %721 = vmatprep.subr.bf16.mxu0 0
    %722 = vmatpush1.bf16.msra.mxu0 %v509
    %723 = vmatprep.subr.bf16.mxu0 0
    %724 = vmatpush1.bf16.msra.mxu0 %v510
    %725 = vmatprep.subr.bf16.mxu0 0
    %726 = vmatpush1.bf16.msra.mxu0 %v511
    %727 = vmatprep.subr.bf16.mxu0 0
    %728 = vmatpush1.bf16.msra.mxu0 %v512
    %729 = vmatprep.mubr.bf16.mxu0 %v57
    %730 = vmatmul.mubr.bf16.gmra.mrb[0].mxu0 %v56
    %v731 = vpop.f32.mrb[0].mxu0
    %v732 = vadd.f32 %v692, %v731
    %v733 = vpop.f32.mrb[0].mxu0
    %v734 = vpop.f32.mrb[0].mxu0
    %v735 = vpop.f32.mrb[0].mxu0
    %736 = vdwg.mxu0
    %737 = vst [vmem:[#allocation7] sm:$0xff] %v732
    // Predicated region
    $region22: #{tpu_custom_call.1} parent=1 // pred_check
      _
    $region23: #{tpu_custom_call.1} parent=1 // pred_check_branch
      %739 = sbr.rel (0) target = $region25
    $region24: #{tpu_custom_call.1} parent=1 // pred_region
      %s741 = ssub.s32 128, 128
      %742 = vsyncadd [#allocation4], %s741
      %s744 = sshll.u32 [#allocation7], 4
      %s745 = int_to_ptr.vmem [resolvable:$true] %s744
      %747 = dma.vmem_to_hbm [thread:$0]  %s745, 128, %s3, [#allocation4]
    $region25: #{tpu_custom_call.1} parent=1 // pred_fallthru
      _
    // Predicated region
    $region26: #{tpu_custom_call.1} parent=1 // pred_check
      _
    $region27: #{tpu_custom_call.1} parent=1 // pred_check_branch
      %749 = sbr.rel (0) target = $region29
    $region28: #{tpu_custom_call.1} parent=1 // pred_region
      %750 = dma.done [#allocation4], 128
    $region29: #{tpu_custom_call.1} parent=1 // pred_fallthru
      _
    %751 = vsyncpa [#allocation3], 1
    %752 = vsyncpa [#allocation6], 1
    %753 = vsyncpa [#allocation4], 1

</llo_original>
